<compile_context>
chip_gen: v5e
topology: v5e:2x2
jax: 0.10.0
libtpu: 0.0.40
codegen_flags: <defaults>
</compile_context>

<pallas_src>
import functools

import jax
import jax.numpy as jnp
from jax import lax
from jax.experimental import pallas as pl
from jax.experimental.pallas import tpu as pltpu

LEAKY_SLOPE = 0.01   # nn.LeakyReLU default
BN_EPS = 1e-5        # nn.BatchNorm1d default


def _round_up(x, m):
    return (x + m - 1) // m * m


def lbd_kernel(x_ref, wt_ref, pgb_ref, bits_ref, o_ref, acc_ref, *,
               batch_flag: bool, drop_p: float, keep_threshold: int):
    """Grid = (fout_tiles, fin_tiles); fin is the reduction axis (last)."""
    k = pl.program_id(1)

    # ---- init accumulator at the first reduction step ----
    @pl.when(k == 0)
    def _():
        acc_ref[...] = jnp.zeros_like(acc_ref)

    # ---- Linear partial product on the MXU (f32 accumulate) ----
    acc_ref[...] += jnp.dot(x_ref[...], wt_ref[...],
                            preferred_element_type=jnp.float32)

    # ---- epilogue at the last reduction step ----
    @pl.when(k == pl.num_programs(1) - 1)
    def _():
        params = pgb_ref[...].astype(jnp.float32)   # (3, tf): bias/gamma/beta
        bias = params[0:1, :]
        gamma = params[1:2, :]
        beta = params[2:3, :]

        y = acc_ref[...] + bias

        # LeakyReLU
        y = jnp.where(y >= 0.0, y, LEAKY_SLOPE * y)

        # BatchNorm1d (training mode): batch mean, biased batch variance.
        # The full batch dimension is resident in this block, so the stats are
        # exact even though Fout is tiled (BN is per-feature).
        if batch_flag:
            mean = jnp.mean(y, axis=0, keepdims=True)
            diff = y - mean
            var = jnp.mean(diff * diff, axis=0, keepdims=True)
            y = diff * lax.rsqrt(var + BN_EPS)
            y = y * gamma + beta

        # Dropout (training mode): single u32 compare per element.
        if drop_p > 0.0:
            keep = bits_ref[...] < jnp.uint32(keep_threshold)
            y = jnp.where(keep, y * (1.0 / (1.0 - drop_p)), 0.0)

        o_ref[...] = y.astype(o_ref.dtype)


def lbd_forward(x, weight, bias, gamma, beta, *, batch_flag, drop_p,
                rng_key=None, fout_tile=128, fin_tile=128):
    """x: (N, Fin) float32.  weight: (Fout, Fin) (PyTorch layout)."""
    n, fin = x.shape
    fout = weight.shape[0]
    dtype = x.dtype

    # Pad feature dims up to MXU/lane-aligned tile multiples (zero pad is
    # numerically inert for the matmul; padded output columns are sliced off).
    fin_p = _round_up(fin, fin_tile)
    fout_p = _round_up(fout, fout_tile)

    xp = x if fin_p == fin else jnp.pad(x, ((0, 0), (0, fin_p - fin)))
    wt = jnp.asarray(weight).T.astype(dtype)                       # (Fin, Fout)
    wt = jnp.pad(wt, ((0, fin_p - fin), (0, fout_p - fout)))

    pad_f = fout_p - fout
    pgb = jnp.stack([                                              # (3, Fout_p)
        jnp.pad(jnp.asarray(bias, dtype), (0, pad_f)),
        jnp.pad(jnp.asarray(gamma, dtype), (0, pad_f), constant_values=1.0),
        jnp.pad(jnp.asarray(beta, dtype), (0, pad_f)),
    ])

    if drop_p > 0.0:
        if rng_key is None:
            rng_key = jax.random.PRNGKey(0)
        bits = jax.random.bits(rng_key, (n, fout_p), dtype=jnp.uint32)
        keep_threshold = min(int(round((1.0 - float(drop_p)) * 2.0**32)),
                             2**32 - 1)
    else:
        bits = jnp.zeros((n, fout_p), dtype=jnp.uint32)
        keep_threshold = 0

    grid = (fout_p // fout_tile, fin_p // fin_tile)

    kernel = functools.partial(
        lbd_kernel, batch_flag=bool(batch_flag), drop_p=float(drop_p),
        keep_threshold=keep_threshold)

    cost = pl.CostEstimate(
        flops=2 * n * fin_p * fout_p,
        transcendentals=n * fout_p,            # rsqrt path
        bytes_accessed=(xp.size + wt.size + pgb.size + n * fout_p) * 4
                       + bits.size * 4,
    )

    out = pl.pallas_call(
        kernel,
        out_shape=jax.ShapeDtypeStruct((n, fout_p), dtype),
        grid=grid,
        in_specs=[
            pl.BlockSpec((n, fin_tile), lambda j, k: (0, k)),          # x
            pl.BlockSpec((fin_tile, fout_tile), lambda j, k: (k, j)),  # W.T
            pl.BlockSpec((3, fout_tile), lambda j, k: (0, j)),         # b/g/beta
            pl.BlockSpec((n, fout_tile), lambda j, k: (0, j)),         # rng bits
        ],
        out_specs=pl.BlockSpec((n, fout_tile), lambda j, k: (0, j)),
        scratch_shapes=[pltpu.VMEM((n, fout_tile), jnp.float32)],
        compiler_params=pltpu.CompilerParams(
            dimension_semantics=("parallel", "arbitrary"),
            vmem_limit_bytes=48 * 1024 * 1024),
        cost_estimate=cost,
    )(xp, wt, pgb, bits)

    return out[:, :fout] if fout_p != fout else out


def _reference(x, weight, bias, gamma, beta, *, batch_flag):
    """Pure-JAX reference of the deterministic part (dropout disabled)."""
    y = x @ weight.T + bias
    y = jnp.where(y >= 0.0, y, LEAKY_SLOPE * y)
    if batch_flag:
        mean = jnp.mean(y, axis=0, keepdims=True)
        var = jnp.mean((y - mean) ** 2, axis=0, keepdims=True)
        y = (y - mean) * lax.rsqrt(var + BN_EPS) * gamma + beta
    return y


if __name__ == "__main__":
    # Small, MXU/lane-aligned shapes (batch fully resident for exact BN stats).
    batch, input_size, output_size = 64, 256, 256
    batch_flag = True
    drop_p = 0.25

    key = jax.random.PRNGKey(0)
    kx, kw, kb, kd = jax.random.split(key, 4)

    x = jax.random.normal(kx, (batch, input_size), dtype=jnp.float32)

    # kaiming_normal_ (fan_in, leaky_relu a=0): std = sqrt(2 / fan_in)
    w_std = (2.0 / input_size) ** 0.5
    weight = jax.random.normal(kw, (output_size, input_size),
                               dtype=jnp.float32) * w_std
    # nn.Linear default bias init: U(-1/sqrt(fan_in), 1/sqrt(fan_in))
    bound = 1.0 / (input_size ** 0.5)
    bias = jax.random.uniform(kb, (output_size,), dtype=jnp.float32,
                              minval=-bound, maxval=bound)
    # BatchNorm1d defaults: gamma=1, beta=0
    gamma = jnp.ones((output_size,), dtype=jnp.float32)
    beta = jnp.zeros((output_size,), dtype=jnp.float32)

    # 1) Deterministic path (drop_p=0) checked against a pure-JAX reference.
    #    Tolerance is loose enough to cover MXU default-precision matmul passes.
    out_det = lbd_forward(x, weight, bias, gamma, beta,
                          batch_flag=batch_flag, drop_p=0.0)
    out_det = jax.block_until_ready(out_det)
    ref = _reference(x, weight, bias, gamma, beta, batch_flag=batch_flag)
    assert out_det.shape == ref.shape
    assert jnp.allclose(out_det, ref, atol=2e-2, rtol=2e-2), "mismatch vs ref"

    # 2) Full forward with training-mode dropout.
    out = lbd_forward(x, weight, bias, gamma, beta,
                      batch_flag=batch_flag, drop_p=drop_p, rng_key=kd)
    out = jax.block_until_ready(out)
    assert out.shape == (batch, output_size)
    assert bool(jnp.all(jnp.isfinite(out)))
    # TODO(synk): BatchNorm1d running_mean/running_var updates (module state)
    # are not materialized; only the training-mode forward output is computed.

    print("KERNEL_OK")
</pallas_src>

<mosaic_0001>
module attributes {stable_mosaic.version = 11 : i64} {
  func.func @lbd_kernel(%arg0: i32, %arg1: i32, %arg2: memref<64x128xf32, #tpu.memory_space<vmem>>, %arg3: memref<128x128xf32, #tpu.memory_space<vmem>>, %arg4: memref<3x128xf32, #tpu.memory_space<vmem>>, %arg5: memref<64x128xi32, #tpu.memory_space<vmem>>, %arg6: memref<64x128xf32, #tpu.memory_space<vmem>>, %arg7: memref<64x128xf32, #tpu.memory_space<vmem>>) attributes {dimension_semantics = [#tpu.dimension_semantics<parallel>, #tpu.dimension_semantics<arbitrary>], iteration_bounds = array<i64: 2, 2>, scalar_prefetch = 0 : i64, scratch_operands = 1 : i64, tpu.core_type = #tpu.core_type<tc>, window_params = [{transform_indices = @transform_0, window_bounds = array<i64: 64, 128>}, {transform_indices = @transform_1, window_bounds = array<i64: 128, 128>}, {transform_indices = @transform_2, window_bounds = array<i64: 3, 128>}, {transform_indices = @transform_3, window_bounds = array<i64: 64, 128>}, {transform_indices = @transform_4, window_bounds = array<i64: 64, 128>}]} {
    %c0_i32 = arith.constant 0 : i32
    %0 = arith.cmpi eq, %arg1, %c0_i32 : i32
    %1 = arith.extui %0 : i1 to i32
    %c0_i32_0 = arith.constant 0 : i32
    %2 = arith.cmpi ne, %1, %c0_i32_0 : i32
    scf.if %2 {
      %cst_9 = arith.constant 0.000000e+00 : f32
      %12 = vector.broadcast %cst_9 : f32 to vector<64x128xf32>
      %c0_10 = arith.constant 0 : index
      %c0_11 = arith.constant 0 : index
      %13 = vector.load %arg7[%c0_10, %c0_11] : memref<64x128xf32, #tpu.memory_space<vmem>>, vector<64x128xf32>
      tpu.vector_store %arg7[%c0_10, %c0_11], %12 {strides = array<i32>} : memref<64x128xf32, #tpu.memory_space<vmem>>, vector<64x128xf32>,
    } else {
    }
    %c0 = arith.constant 0 : index
    %c0_1 = arith.constant 0 : index
    %3 = vector.load %arg7[%c0, %c0_1] : memref<64x128xf32, #tpu.memory_space<vmem>>, vector<64x128xf32>
    %c0_2 = arith.constant 0 : index
    %c0_3 = arith.constant 0 : index
    %4 = vector.load %arg2[%c0_2, %c0_3] : memref<64x128xf32, #tpu.memory_space<vmem>>, vector<64x128xf32>
    %c0_4 = arith.constant 0 : index
    %c0_5 = arith.constant 0 : index
    %5 = vector.load %arg3[%c0_4, %c0_5] : memref<128x128xf32, #tpu.memory_space<vmem>>, vector<128x128xf32>
    %cst = arith.constant dense<0.000000e+00> : vector<64x128xf32>
    %6 = tpu.matmul %4, %5, %cst {dimension_numbers = #tpu.dot_dimension_numbers<[1], [0], [0], [1], [0, 0, 1, 1], [], []>} : vector<64x128xf32>, vector<128x128xf32>, vector<64x128xf32> -> vector<64x128xf32>
    %7 = arith.addf %3, %6 : vector<64x128xf32>
    %c0_6 = arith.constant 0 : index
    %c0_7 = arith.constant 0 : index
    %8 = vector.load %arg7[%c0_6, %c0_7] : memref<64x128xf32, #tpu.memory_space<vmem>>, vector<64x128xf32>
    tpu.vector_store %arg7[%c0_6, %c0_7], %7 {strides = array<i32>} : memref<64x128xf32, #tpu.memory_space<vmem>>, vector<64x128xf32>,
    %c1_i32 = arith.constant 1 : i32
    %9 = arith.cmpi eq, %arg1, %c1_i32 : i32
    %10 = arith.extui %9 : i1 to i32
    %c0_i32_8 = arith.constant 0 : i32
    %11 = arith.cmpi ne, %10, %c0_i32_8 : i32
    scf.if %11 {
      %c0_9 = arith.constant 0 : index
      %c0_10 = arith.constant 0 : index
      %12 = vector.load %arg4[%c0_9, %c0_10] : memref<3x128xf32, #tpu.memory_space<vmem>>, vector<3x128xf32>
      %13 = vector.extract_strided_slice %12 {offsets = [0, 0], sizes = [1, 128], strides = [1, 1]} : vector<3x128xf32> to vector<1x128xf32>
      %14 = vector.extract_strided_slice %12 {offsets = [1, 0], sizes = [1, 128], strides = [1, 1]} : vector<3x128xf32> to vector<1x128xf32>
      %15 = vector.extract_strided_slice %12 {offsets = [2, 0], sizes = [1, 128], strides = [1, 1]} : vector<3x128xf32> to vector<1x128xf32>
      %c0_11 = arith.constant 0 : index
      %c0_12 = arith.constant 0 : index
      %16 = vector.load %arg7[%c0_11, %c0_12] : memref<64x128xf32, #tpu.memory_space<vmem>>, vector<64x128xf32>
      %17 = vector.broadcast %13 : vector<1x128xf32> to vector<64x128xf32>
      %18 = arith.addf %16, %17 : vector<64x128xf32>
      %cst_13 = arith.constant 0.000000e+00 : f32
      %19 = vector.broadcast %cst_13 : f32 to vector<64x128xf32>
      %20 = arith.cmpf oge, %18, %19 : vector<64x128xf32>
      %cst_14 = arith.constant 0.00999999977 : f32
      %21 = vector.broadcast %cst_14 : f32 to vector<64x128xf32>
      %22 = arith.mulf %21, %18 : vector<64x128xf32>
      %23 = arith.select %20, %18, %22 : vector<64x128xi1>, vector<64x128xf32>
      %cst_15 = arith.constant dense<0.000000e+00> : vector<128xf32>
      %24 = vector.multi_reduction <add>, %23, %cst_15 [0] : vector<64x128xf32> to vector<128xf32>
      %25 = vector.shape_cast %24 : vector<128xf32> to vector<1x128xf32>
      %cst_16 = arith.constant 6.400000e+01 : f32
      %26 = vector.broadcast %cst_16 : f32 to vector<1x128xf32>
      %27 = arith.divf %25, %26 : vector<1x128xf32>
      %28 = vector.broadcast %27 : vector<1x128xf32> to vector<64x128xf32>
      %29 = arith.subf %23, %28 : vector<64x128xf32>
      %30 = arith.mulf %29, %29 : vector<64x128xf32>
      %cst_17 = arith.constant dense<0.000000e+00> : vector<128xf32>
      %31 = vector.multi_reduction <add>, %30, %cst_17 [0] : vector<64x128xf32> to vector<128xf32>
      %32 = vector.shape_cast %31 : vector<128xf32> to vector<1x128xf32>
      %cst_18 = arith.constant 6.400000e+01 : f32
      %33 = vector.broadcast %cst_18 : f32 to vector<1x128xf32>
      %34 = arith.divf %32, %33 : vector<1x128xf32>
      %cst_19 = arith.constant 9.99999974E-6 : f32
      %35 = vector.broadcast %cst_19 : f32 to vector<1x128xf32>
      %36 = arith.addf %34, %35 : vector<1x128xf32>
      %37 = math.rsqrt %36 : vector<1x128xf32>
      %38 = vector.broadcast %37 : vector<1x128xf32> to vector<64x128xf32>
      %39 = arith.mulf %29, %38 : vector<64x128xf32>
      %40 = vector.broadcast %14 : vector<1x128xf32> to vector<64x128xf32>
      %41 = arith.mulf %39, %40 : vector<64x128xf32>
      %42 = vector.broadcast %15 : vector<1x128xf32> to vector<64x128xf32>
      %43 = arith.addf %41, %42 : vector<64x128xf32>
      %c0_20 = arith.constant 0 : index
      %c0_21 = arith.constant 0 : index
      %44 = vector.load %arg6[%c0_20, %c0_21] : memref<64x128xf32, #tpu.memory_space<vmem>>, vector<64x128xf32>
      tpu.vector_store %arg6[%c0_20, %c0_21], %43 {strides = array<i32>} : memref<64x128xf32, #tpu.memory_space<vmem>>, vector<64x128xf32>,
    } else {
    }
    return
  }
  func.func @transform_0(%arg0: i32, %arg1: i32) -> (i32, i32) {
    %c0_i32 = arith.constant 0 : i32
    %c0_i32_0 = arith.constant 0 : i32
    return %c0_i32, %arg1 : i32, i32
  }
  func.func @transform_1(%arg0: i32, %arg1: i32) -> (i32, i32) {
    %c0_i32 = arith.constant 0 : i32
    return %arg1, %arg0 : i32, i32
  }
  func.func @transform_2(%arg0: i32, %arg1: i32) -> (i32, i32) {
    %c0_i32 = arith.constant 0 : i32
    %c0_i32_0 = arith.constant 0 : i32
    return %c0_i32, %arg0 : i32, i32
  }
  func.func @transform_3(%arg0: i32, %arg1: i32) -> (i32, i32) {
    %c0_i32 = arith.constant 0 : i32
    %c0_i32_0 = arith.constant 0 : i32
    return %c0_i32, %arg0 : i32, i32
  }
  func.func @transform_4(%arg0: i32, %arg1: i32) -> (i32, i32) {
    %c0_i32 = arith.constant 0 : i32
    %c0_i32_0 = arith.constant 0 : i32
    return %c0_i32, %arg0 : i32, i32
  }
}

</mosaic_0001>

<llo_original>
// kernel: tpu_custom_call.1
$region0: #{tpu_custom_call.1}
  #allocation0 [shape = 'u32[]', space=smem, size = 0x4, offset = 0x4, fixed_abs, tag = 'smem constant byte address 0x4 - core index']
  #allocation1 [shape = 'u32[72,128]{1,0:T(1,128)}', space=vmem, size = 0x9000, scoped, tag = 'internal scratch']
  #allocation2 [shape = 'f32[64,128]{1,0:T(8,128)}', space=vmem, size = 0x8000, scoped, tag = 'scratch operand']
  %s0 = inlined_call_operand.hbm [shape: f32[64,256], index: 0, kind: input, shape index: {}]
  %s1 = inlined_call_operand.hbm [shape: f32[256,256], index: 1, kind: input, shape index: {}]
  %s2 = inlined_call_operand.hbm [shape: f32[3,256], index: 2, kind: input, shape index: {}]
  %s3 = inlined_call_operand.hbm [shape: u32[64,256], index: 3, kind: input, shape index: {}]
  %s4 = inlined_call_operand.hbm [shape: f32[64,256], index: 4, kind: output, shape index: {}]
  %s5 = sld [smem:[#allocation0]]
  $region73: #{tpu_custom_call.1} parent=0
    _
  %s7 = ssub.s32 1, %s5
  %s8 = scalar_select 0, %s7, %s5
  $region1: #{tpu_custom_call.1} parent=0
    #allocation3 [shape = 'u8[65536]{0}', space=vmem, size = 0x10000, scoped, tag = 'input window, operand 0']
    #allocation4 [shape = 's32[2]{0}', space=sflag, size = 0x8, scoped, tag = 'scoped memory for tpu_custom_call.1']
    #allocation5 [shape = 's32[2]{0}', space=sflag, size = 0x8, scoped, tag = 'scoped memory for tpu_custom_call.1']
    #allocation6 [shape = 'u8[131072]{0}', space=vmem, size = 0x20000, scoped, tag = 'input window, operand 1']
    #allocation7 [shape = 's32[2]{0}', space=sflag, size = 0x8, scoped, tag = 'scoped memory for tpu_custom_call.1']
    #allocation8 [shape = 'u8[4096]{0}', space=vmem, size = 0x1000, scoped, tag = 'input window, operand 2']
    #allocation9 [shape = 'u8[65536]{0}', space=vmem, size = 0x10000, scoped, tag = 'input window, operand 3']
    #allocation10 [shape = 's32[2]{0}', space=sflag, size = 0x8, scoped, tag = 'scoped memory for tpu_custom_call.1']
    #allocation11 [shape = 'u8[65536]{0}', space=vmem, size = 0x10000, scoped, tag = 'output window, operand 0']
    %9 = vsyncpa [#allocation4], 0
    %s10 = scalar_lea.sflag [#allocation4], 1
    %11 = vsyncpa %s10, 0
    %12 = vsyncpa [#allocation7], 0
    %s13 = scalar_lea.sflag [#allocation7], 1
    %14 = vsyncpa %s13, 0
    %15 = vsyncpa [#allocation10], 0
    %s16 = scalar_lea.sflag [#allocation10], 1
    %17 = vsyncpa %s16, 0
    %18 = vsyncpa [#allocation5], 0
    %s19 = scalar_lea.sflag [#allocation5], 1
    %20 = vsyncpa %s19, 0
    loop: start=0, step=1, limit=6
    $region2: #{tpu_custom_call.1} parent=1 // loop_pre_header
      _
    $region3: #{tpu_custom_call.1} parent=1 // loop_header
      %s22 = sphi 0, %s26
      %p23 = scmp.ge.s32.totalorder %s22, 6
      %s29 = sphi 0, %s41
      %s30 = sphi 0, %s37
      %s31 = sphi 0, %s29
      %s32 = sphi 0, %s30
      %s33 = sphi 0, %s31
      %s34 = sphi 0, %s32
      %s44 = sphi 0, %s46
      %s47 = sphi 0, %s44
      %s48 = sphi 0, %s47
      %s64 = sphi 0, %s48
      %s72 = sphi 0, %s74
      %s75 = sphi 0, %s72
      %s76 = sphi 0, %s75
      %s92 = sphi 0, %s76
      %s98 = sphi 0, %s100
      %s101 = sphi 0, %s98
      %s102 = sphi 0, %s101
      %s118 = sphi 0, %s102
      %s124 = sphi 0, %s126
      %s127 = sphi 0, %s124
      %s128 = sphi 0, %s127
      %s144 = sphi 0, %s128
      %s150 = sphi 0, %s152
      %s153 = sphi 0, %s150
      %s154 = sphi 0, %s153
      %s170 = sphi 0, %s154
    $region4: #{tpu_custom_call.1} parent=1 // loop_header_branch
      %25 = sbr.rel (%p23) target = $region8
    $region5: #{tpu_custom_call.1} parent=1 // loop_body
      %s27 = ssub.s32 %s22, 1
      %s28 = ssub.s32 %s22, 2
      %s35 = sadd.s32 1, %s30
      %p36 = scmp.ge.s32.totalorder %s35, 2
      %s37 = scalar_select %p36, 0, %s35
      %s38 = sadd.s32 1, %s29
      %s39 = scalar_select %p36, %s38, %s29
      %p40 = scmp.ge.s32.totalorder %s39, 2
      %s41 = scalar_select %p40, 0, %s39
      %s42 = ssub.s32 %s30, %s37
      %p43 = scmp.eq.s32.totalorder %s42, 0
      %s45 = sadd.s32 %s44, 1
      %s46 = scalar_select %p43, %s44, %s45
      %p49 = pneg %p43
      %p50 = scmp.eq.s32.totalorder %s22, 3
      %p51 = por %p49, %p50
      %p52 = scmp.ne.s32.totalorder %s44, %s47
      %p53 = scmp.eq.s32.totalorder %s22, 0
      %p54 = por %p52, %p53
      %p55 = scmp.ne.s32.totalorder %s44, %s47
      %p56 = scmp.eq.s32.totalorder %s27, 3
      %p57 = por %p55, %p56
      %p58 = scmp.ne.s32.totalorder %s47, %s48
      %p59 = scmp.eq.s32.totalorder %s27, 0
      %p60 = por %p58, %p59
      %p61 = scmp.ne.s32.totalorder %s47, %s48
      %p62 = scmp.eq.s32.totalorder %s28, 3
      %p63 = por %p61, %p62
      %p65 = scmp.ne.s32.totalorder %s48, %s64
      %p66 = scmp.eq.s32.totalorder %s28, 0
      %p67 = por %p65, %p66
      %s68 = ssub.s32 %s30, %s37
      %s69 = ssub.s32 %s29, %s41
      %s70 = sor.u32 %s68, %s69
      %p71 = scmp.eq.s32.totalorder %s70, 0
      %s73 = sadd.s32 %s72, 1
      %s74 = scalar_select %p71, %s72, %s73
      %p77 = pneg %p71
      %p78 = scmp.eq.s32.totalorder %s22, 3
      %p79 = por %p77, %p78
      %p80 = scmp.ne.s32.totalorder %s72, %s75
      %p81 = scmp.eq.s32.totalorder %s22, 0
      %p82 = por %p80, %p81
      %p83 = scmp.ne.s32.totalorder %s72, %s75
      %p84 = scmp.eq.s32.totalorder %s27, 3
      %p85 = por %p83, %p84
      %p86 = scmp.ne.s32.totalorder %s75, %s76
      %p87 = scmp.eq.s32.totalorder %s27, 0
      %p88 = por %p86, %p87
      %p89 = scmp.ne.s32.totalorder %s75, %s76
      %p90 = scmp.eq.s32.totalorder %s28, 3
      %p91 = por %p89, %p90
      %p93 = scmp.ne.s32.totalorder %s76, %s92
      %p94 = scmp.eq.s32.totalorder %s28, 0
      %p95 = por %p93, %p94
      %s96 = ssub.s32 %s29, %s41
      %p97 = scmp.eq.s32.totalorder %s96, 0
      %s99 = sadd.s32 %s98, 1
      %s100 = scalar_select %p97, %s98, %s99
      %p103 = pneg %p97
      %p104 = scmp.eq.s32.totalorder %s22, 3
      %p105 = por %p103, %p104
      %p106 = scmp.ne.s32.totalorder %s98, %s101
      %p107 = scmp.eq.s32.totalorder %s22, 0
      %p108 = por %p106, %p107
      %p109 = scmp.ne.s32.totalorder %s98, %s101
      %p110 = scmp.eq.s32.totalorder %s27, 3
      %p111 = por %p109, %p110
      %p112 = scmp.ne.s32.totalorder %s101, %s102
      %p113 = scmp.eq.s32.totalorder %s27, 0
      %p114 = por %p112, %p113
      %p115 = scmp.ne.s32.totalorder %s101, %s102
      %p116 = scmp.eq.s32.totalorder %s28, 3
      %p117 = por %p115, %p116
      %p119 = scmp.ne.s32.totalorder %s102, %s118
      %p120 = scmp.eq.s32.totalorder %s28, 0
      %p121 = por %p119, %p120
      %s122 = ssub.s32 %s29, %s41
      %p123 = scmp.eq.s32.totalorder %s122, 0
      %s125 = sadd.s32 %s124, 1
      %s126 = scalar_select %p123, %s124, %s125
      %p129 = pneg %p123
      %p130 = scmp.eq.s32.totalorder %s22, 3
      %p131 = por %p129, %p130
      %p132 = scmp.ne.s32.totalorder %s124, %s127
      %p133 = scmp.eq.s32.totalorder %s22, 0
      %p134 = por %p132, %p133
      %p135 = scmp.ne.s32.totalorder %s124, %s127
      %p136 = scmp.eq.s32.totalorder %s27, 3
      %p137 = por %p135, %p136
      %p138 = scmp.ne.s32.totalorder %s127, %s128
      %p139 = scmp.eq.s32.totalorder %s27, 0
      %p140 = por %p138, %p139
      %p141 = scmp.ne.s32.totalorder %s127, %s128
      %p142 = scmp.eq.s32.totalorder %s28, 3
      %p143 = por %p141, %p142
      %p145 = scmp.ne.s32.totalorder %s128, %s144
      %p146 = scmp.eq.s32.totalorder %s28, 0
      %p147 = por %p145, %p146
      %s148 = ssub.s32 %s29, %s41
      %p149 = scmp.eq.s32.totalorder %s148, 0
      %s151 = sadd.s32 %s150, 1
      %s152 = scalar_select %p149, %s150, %s151
      %p155 = pneg %p149
      %p156 = scmp.eq.s32.totalorder %s22, 3
      %p157 = por %p155, %p156
      %p158 = scmp.ne.s32.totalorder %s150, %s153
      %p159 = scmp.eq.s32.totalorder %s22, 0
      %p160 = por %p158, %p159
      %p161 = scmp.ne.s32.totalorder %s150, %s153
      %p162 = scmp.eq.s32.totalorder %s27, 3
      %p163 = por %p161, %p162
      %p164 = scmp.ne.s32.totalorder %s153, %s154
      %p165 = scmp.eq.s32.totalorder %s27, 0
      %p166 = por %p164, %p165
      %p167 = scmp.ne.s32.totalorder %s153, %s154
      %p168 = scmp.eq.s32.totalorder %s28, 3
      %p169 = por %p167, %p168
      %p171 = scmp.ne.s32.totalorder %s154, %s170
      %p172 = scmp.eq.s32.totalorder %s28, 0
      %p173 = por %p171, %p172
      %p174 = scmp.le.s32.totalorder 1, %s22
      %p175 = scmp.lt.s32.totalorder %s22, 5
      %p176 = pnand %p174, %p175
      %p177 = pneg %p176
      // Predicated region
      $region9: #{tpu_custom_call.1} parent=5 // pred_check
        _
      $region10: #{tpu_custom_call.1} parent=5 // pred_check_branch
        %179 = sbr.rel (%p176) target = $region12
      $region11: #{tpu_custom_call.1} parent=5 // pred_region
        %s180 = ssub.s32 %s22, 1
      $region12: #{tpu_custom_call.1} parent=5 // pred_fallthru
        _
      %p181 = scmp.lt.s32.totalorder %s22, 4
      // Predicated region
      $region13: #{tpu_custom_call.1} parent=5 // pred_check
        %p182 = pneg %p181
      $region14: #{tpu_custom_call.1} parent=5 // pred_check_branch
        %184 = sbr.rel (%p182) target = $region16
      $region15: #{tpu_custom_call.1} parent=5 // pred_region
        // Predicated region
        $region17: #{tpu_custom_call.1} parent=15 // pred_check
          %p185 = pneg %p54
        $region18: #{tpu_custom_call.1} parent=15 // pred_check_branch
          %187 = sbr.rel (%p185) target = $region20
        $region19: #{tpu_custom_call.1} parent=15 // pred_region
          %s188 = sand.u32 %s44, 1
          %s189 = scalar_lea.sflag [#allocation4], %s188
          %s190 = sand.u32 %s44, 1
          %s191 = smul.addr %s190, 64
          %s192 = scalar_lea.vmem [#allocation3], %s191
          %194 = vsyncadd %s189, 0
          %s195 = smul.addr %s30, 8
          %s196 = scalar_lea.hbm %s0, %s195
          %s197 = sshll.u32 %s196, 4
          %s198 = int_to_ptr.hbm [resolvable:$true] %s197
          %s199 = sshll.u32 %s192, 4
          %s200 = int_to_ptr.vmem [resolvable:$true] %s199
          %205 = dma.hbm_to_vmem [thread:$0]  %s198, 1024, %s200, %s189, 256, 128, 8
        $region20: #{tpu_custom_call.1} parent=15 // pred_fallthru
          _
        // Predicated region
        $region21: #{tpu_custom_call.1} parent=15 // pred_check
          %p206 = pneg %p82
        $region22: #{tpu_custom_call.1} parent=15 // pred_check_branch
          %208 = sbr.rel (%p206) target = $region24
        $region23: #{tpu_custom_call.1} parent=15 // pred_region
          %s209 = sand.u32 %s22, 1
          %s210 = scalar_lea.sflag [#allocation7], %s209
          %s211 = sand.u32 %s72, 1
          %s212 = smul.addr %s211, 128
          %s213 = scalar_lea.vmem [#allocation6], %s212
          %s214 = smul.u32 16, %s30
          %216 = vsyncadd %s210, 0
          %s217 = smul.addr %s214, 2
          %s218 = sadd.s32 %s29, %s217
          %s219 = smul.addr %s218, 8
          %s220 = scalar_lea.hbm %s1, %s219
          %s221 = sshll.u32 %s220, 4
          %s222 = int_to_ptr.hbm [resolvable:$true] %s221
          %s223 = sshll.u32 %s213, 4
          %s224 = int_to_ptr.vmem [resolvable:$true] %s223
          %229 = dma.hbm_to_vmem [thread:$0]  %s222, 2048, %s224, %s210, 256, 128, 8
        $region24: #{tpu_custom_call.1} parent=15 // pred_fallthru
          _
        // Predicated region
        $region25: #{tpu_custom_call.1} parent=15 // pred_check
          %p230 = pneg %p108
        $region26: #{tpu_custom_call.1} parent=15 // pred_check_branch
          %232 = sbr.rel (%p230) target = $region28
        $region27: #{tpu_custom_call.1} parent=15 // pred_region
          %s233 = sand.u32 %s22, 1
          %s234 = scalar_lea.sflag [#allocation7], %s233
          %s235 = sand.u32 %s98, 1
          %s236 = smul.addr %s235, 4
          %s237 = scalar_lea.vmem [#allocation8], %s236
          %239 = vsyncadd %s234, 0
          %s240 = smul.addr %s29, 4
          %s241 = scalar_lea.hbm %s2, %s240
          %s243 = sshll.u32 %s241, 4
          %s244 = int_to_ptr.hbm [resolvable:$true] %s243
          %s245 = sshll.u32 %s237, 4
          %s246 = int_to_ptr.vmem [resolvable:$true] %s245
          %248 = dma.hbm_to_vmem [thread:$0]  %s244, 64, %s246, %s234
        $region28: #{tpu_custom_call.1} parent=15 // pred_fallthru
          _
        // Predicated region
        $region29: #{tpu_custom_call.1} parent=15 // pred_check
          %p249 = pneg %p134
        $region30: #{tpu_custom_call.1} parent=15 // pred_check_branch
          %251 = sbr.rel (%p249) target = $region32
        $region31: #{tpu_custom_call.1} parent=15 // pred_region
          %s252 = sand.u32 %s124, 1
          %s253 = scalar_lea.sflag [#allocation10], %s252
          %s254 = sand.u32 %s124, 1
          %s255 = smul.addr %s254, 64
          %s256 = scalar_lea.vmem [#allocation9], %s255
          %258 = vsyncadd %s253, 0
          %s259 = smul.addr %s29, 8
          %s260 = scalar_lea.hbm %s3, %s259
          %s261 = sshll.u32 %s260, 4
          %s262 = int_to_ptr.hbm [resolvable:$true] %s261
          %s263 = sshll.u32 %s256, 4
          %s264 = int_to_ptr.vmem [resolvable:$true] %s263
          %269 = dma.hbm_to_vmem [thread:$0]  %s262, 1024, %s264, %s253, 256, 128, 8
        $region32: #{tpu_custom_call.1} parent=15 // pred_fallthru
          _
      $region16: #{tpu_custom_call.1} parent=5 // pred_fallthru
        _
      %p270 = scmp.le.s32.totalorder 1, %s22
      %p271 = scmp.lt.s32.totalorder %s22, 5
      %p272 = pnand %p270, %p271
      %p273 = pneg %p272
      // Predicated region
      $region33: #{tpu_custom_call.1} parent=5 // pred_check
        _
      $region34: #{tpu_custom_call.1} parent=5 // pred_check_branch
        %275 = sbr.rel (%p272) target = $region36
      $region35: #{tpu_custom_call.1} parent=5 // pred_region
        %s276 = ssub.s32 %s22, 1
        %s277 = sand.u32 %s47, 1
        %s278 = scalar_lea.sflag [#allocation4], %s277
        %s279 = sand.u32 %s47, 1
        %s280 = smul.addr %s279, 64
        %s281 = scalar_lea.vmem [#allocation3], %s280
        // Predicated region
        $region37: #{tpu_custom_call.1} parent=35 // pred_check
          %p282 = pneg %p60
        $region38: #{tpu_custom_call.1} parent=35 // pred_check_branch
          %284 = sbr.rel (%p282) target = $region40
        $region39: #{tpu_custom_call.1} parent=35 // pred_region
          %286 = dma.done %s278, 1024
        $region40: #{tpu_custom_call.1} parent=35 // pred_fallthru
          _
        %s287 = sand.u32 %s27, 1
        %s288 = scalar_lea.sflag [#allocation7], %s287
        %s289 = sand.u32 %s75, 1
        %s290 = smul.addr %s289, 128
        %s291 = scalar_lea.vmem [#allocation6], %s290
        // Predicated region
        $region41: #{tpu_custom_call.1} parent=35 // pred_check
          %p292 = pneg %p88
        $region42: #{tpu_custom_call.1} parent=35 // pred_check_branch
          %294 = sbr.rel (%p292) target = $region44
        $region43: #{tpu_custom_call.1} parent=35 // pred_region
          %296 = dma.done %s288, 2048
        $region44: #{tpu_custom_call.1} parent=35 // pred_fallthru
          _
        %s297 = sand.u32 %s27, 1
        %s298 = scalar_lea.sflag [#allocation7], %s297
        %s299 = sand.u32 %s101, 1
        %s300 = smul.addr %s299, 4
        %s301 = scalar_lea.vmem [#allocation8], %s300
        // Predicated region
        $region45: #{tpu_custom_call.1} parent=35 // pred_check
          %p302 = pneg %p114
        $region46: #{tpu_custom_call.1} parent=35 // pred_check_branch
          %304 = sbr.rel (%p302) target = $region48
        $region47: #{tpu_custom_call.1} parent=35 // pred_region
          %306 = dma.done %s298, 64
        $region48: #{tpu_custom_call.1} parent=35 // pred_fallthru
          _
        %s307 = sand.u32 %s127, 1
        %s308 = scalar_lea.sflag [#allocation10], %s307
        %s309 = sand.u32 %s127, 1
        %s310 = smul.addr %s309, 64
        %s311 = scalar_lea.vmem [#allocation9], %s310
        // Predicated region
        $region49: #{tpu_custom_call.1} parent=35 // pred_check
          %p312 = pneg %p140
        $region50: #{tpu_custom_call.1} parent=35 // pred_check_branch
          %314 = sbr.rel (%p312) target = $region52
        $region51: #{tpu_custom_call.1} parent=35 // pred_region
          %316 = dma.done %s308, 1024
        $region52: #{tpu_custom_call.1} parent=35 // pred_fallthru
          _
        %s317 = sand.u32 %s47, 1
        %s318 = scalar_lea.sflag [#allocation4], %s317
        %s319 = sand.u32 %s47, 1
        %s320 = smul.addr %s319, 64
        %s321 = scalar_lea.vmem [#allocation3], %s320
        %p322 = pneg %p60
        %p323 = pneg %p57
        %s324 = sand.u32 %s27, 1
        %s325 = scalar_lea.sflag [#allocation7], %s324
        %s326 = sand.u32 %s75, 1
        %s327 = smul.addr %s326, 128
        %s328 = scalar_lea.vmem [#allocation6], %s327
        %p329 = pneg %p88
        %p330 = pneg %p85
        %s331 = sand.u32 %s27, 1
        %s332 = scalar_lea.sflag [#allocation7], %s331
        %s333 = sand.u32 %s101, 1
        %s334 = smul.addr %s333, 4
        %s335 = scalar_lea.vmem [#allocation8], %s334
        %p336 = pneg %p114
        %p337 = pneg %p111
        %s338 = sand.u32 %s127, 1
        %s339 = scalar_lea.sflag [#allocation10], %s338
        %s340 = sand.u32 %s127, 1
        %s341 = smul.addr %s340, 64
        %s342 = scalar_lea.vmem [#allocation9], %s341
        %p343 = pneg %p140
        %p344 = pneg %p137
        %p345 = pneg %p166
        %p346 = pneg %p163
        %s347 = sand.u32 %s153, 1
        %s348 = scalar_lea.sflag [#allocation5], %s347
        %s349 = sand.u32 %s153, 1
        %s350 = smul.addr %s349, 64
        %s351 = scalar_lea.vmem [#allocation11], %s350
        %s352 = smul.u32 16, %s32
        %p353 = scmp.eq.s32.totalorder %s32, 0
        // Predicated region
        $region53: #{tpu_custom_call.1} parent=35 // pred_check
          %p354 = pneg %p353
        $region54: #{tpu_custom_call.1} parent=35 // pred_check_branch
          %356 = sbr.rel (%p354) target = $region56
        $region55: #{tpu_custom_call.1} parent=35 // pred_region
          %357 = vst [vmem:[#allocation2] sm:$0xff] 0.0
          %358 = vst [vmem:[#allocation2 + $0x8] sm:$0xff] 0.0
          %359 = vst [vmem:[#allocation2 + $0x10] sm:$0xff] 0.0
          %360 = vst [vmem:[#allocation2 + $0x18] sm:$0xff] 0.0
          %361 = vst [vmem:[#allocation2 + $0x20] sm:$0xff] 0.0
          %362 = vst [vmem:[#allocation2 + $0x28] sm:$0xff] 0.0
          %363 = vst [vmem:[#allocation2 + $0x30] sm:$0xff] 0.0
          %364 = vst [vmem:[#allocation2 + $0x38] sm:$0xff] 0.0
        $region56: #{tpu_custom_call.1} parent=35 // pred_fallthru
          _
        %v365 = vld [vmem:[#allocation2] sm:$0xff]
        %v366 = vld [vmem:[#allocation2 + $0x8] sm:$0xff]
        %v367 = vld [vmem:[#allocation2 + $0x10] sm:$0xff]
        %v368 = vld [vmem:[#allocation2 + $0x18] sm:$0xff]
        %v369 = vld [vmem:[#allocation2 + $0x20] sm:$0xff]
        %v370 = vld [vmem:[#allocation2 + $0x28] sm:$0xff]
        %v371 = vld [vmem:[#allocation2 + $0x30] sm:$0xff]
        %v372 = vld [vmem:[#allocation2 + $0x38] sm:$0xff]
        %v373 = vld [vmem:[%s281] sm:$0xff]
        %v374 = vld [vmem:[%s281 + $0x8] sm:$0xff]
        %v375 = vld [vmem:[%s281 + $0x10] sm:$0xff]
        %v376 = vld [vmem:[%s281 + $0x18] sm:$0xff]
        %v377 = vld [vmem:[%s281 + $0x20] sm:$0xff]
        %v378 = vld [vmem:[%s281 + $0x28] sm:$0xff]
        %v379 = vld [vmem:[%s281 + $0x30] sm:$0xff]
        %v380 = vld [vmem:[%s281 + $0x38] sm:$0xff]
        %v381 = vld [vmem:[%s291] sm:$0xff]
        %v382 = vld [vmem:[%s291 + $0x8] sm:$0xff]
        %v383 = vld [vmem:[%s291 + $0x10] sm:$0xff]
        %v384 = vld [vmem:[%s291 + $0x18] sm:$0xff]
        %v385 = vld [vmem:[%s291 + $0x20] sm:$0xff]
        %v386 = vld [vmem:[%s291 + $0x28] sm:$0xff]
        %v387 = vld [vmem:[%s291 + $0x30] sm:$0xff]
        %v388 = vld [vmem:[%s291 + $0x38] sm:$0xff]
        %v389 = vld [vmem:[%s291 + $0x40] sm:$0xff]
        %v390 = vld [vmem:[%s291 + $0x48] sm:$0xff]
        %v391 = vld [vmem:[%s291 + $0x50] sm:$0xff]
        %v392 = vld [vmem:[%s291 + $0x58] sm:$0xff]
        %v393 = vld [vmem:[%s291 + $0x60] sm:$0xff]
        %v394 = vld [vmem:[%s291 + $0x68] sm:$0xff]
        %v395 = vld [vmem:[%s291 + $0x70] sm:$0xff]
        %v396 = vld [vmem:[%s291 + $0x78] sm:$0xff]
        %397 = vmatpush.msra.mxu0 %v396
        %398 = vmatpush.msra.mxu0 %v395
        %399 = vmatpush.msra.mxu0 %v394
        %400 = vmatpush.msra.mxu0 %v393
        %401 = vmatpush.msra.mxu0 %v392
        %402 = vmatpush.msra.mxu0 %v391
        %403 = vmatpush.msra.mxu0 %v390
        %404 = vmatpush.msra.mxu0 %v389
        %405 = vmatpush.msra.mxu0 %v388
        %406 = vmatpush.msra.mxu0 %v387
        %407 = vmatpush.msra.mxu0 %v386
        %408 = vmatpush.msra.mxu0 %v385
        %409 = vmatpush.msra.mxu0 %v384
        %410 = vmatpush.msra.mxu0 %v383
        %411 = vmatpush.msra.mxu0 %v382
        %412 = vmatpush.msra.mxu0 %v381
        %413 = vmatmul.f32.gmra.mxu0 %v373
        %v414 = vpop.f32.mrf.mxu0
        %v415 = vadd.f32 0.0, %v414
        %416 = vmatmul.f32.gmra.mxu0 %v374
        %v417 = vpop.f32.mrf.mxu0
        %v418 = vadd.f32 0.0, %v417
        %419 = vmatmul.f32.gmra.mxu0 %v375
        %v420 = vpop.f32.mrf.mxu0
        %v421 = vadd.f32 0.0, %v420
        %422 = vmatmul.f32.gmra.mxu0 %v376
        %v423 = vpop.f32.mrf.mxu0
        %v424 = vadd.f32 0.0, %v423
        %425 = vmatmul.f32.gmra.mxu0 %v377
        %v426 = vpop.f32.mrf.mxu0
        %v427 = vadd.f32 0.0, %v426
        %428 = vmatmul.f32.gmra.mxu0 %v378
        %v429 = vpop.f32.mrf.mxu0
        %v430 = vadd.f32 0.0, %v429
        %431 = vmatmul.f32.gmra.mxu0 %v379
        %v432 = vpop.f32.mrf.mxu0
        %v433 = vadd.f32 0.0, %v432
        %434 = vmatmul.f32.gmra.mxu0 %v380
        %v435 = vpop.f32.mrf.mxu0
        %v436 = vadd.f32 0.0, %v435
        %437 = vdwg.mxu0
        %v438 = vadd.f32 %v365, %v415
        %v439 = vadd.f32 %v366, %v418
        %v440 = vadd.f32 %v367, %v421
        %v441 = vadd.f32 %v368, %v424
        %v442 = vadd.f32 %v369, %v427
        %v443 = vadd.f32 %v370, %v430
        %v444 = vadd.f32 %v371, %v433
        %v445 = vadd.f32 %v372, %v436
        %446 = vst [vmem:[#allocation2] sm:$0xff] %v438
        %447 = vst [vmem:[#allocation2 + $0x8] sm:$0xff] %v439
        %448 = vst [vmem:[#allocation2 + $0x10] sm:$0xff] %v440
        %449 = vst [vmem:[#allocation2 + $0x18] sm:$0xff] %v441
        %450 = vst [vmem:[#allocation2 + $0x20] sm:$0xff] %v442
        %451 = vst [vmem:[#allocation2 + $0x28] sm:$0xff] %v443
        %452 = vst [vmem:[#allocation2 + $0x30] sm:$0xff] %v444
        %453 = vst [vmem:[#allocation2 + $0x38] sm:$0xff] %v445
        %p454 = scmp.eq.s32.totalorder %s32, 1
        // Predicated region
        $region57: #{tpu_custom_call.1} parent=35 // pred_check
          %p455 = pneg %p454
        $region58: #{tpu_custom_call.1} parent=35 // pred_check_branch
          %457 = sbr.rel (%p455) target = $region60
        $region59: #{tpu_custom_call.1} parent=35 // pred_region
          %v458 = vld [vmem:[%s301] sm:$0x7]
          %v459 = vld [vmem:[#allocation2] sm:$0xff]
          %v460 = vld [vmem:[#allocation2 + $0x8] sm:$0xff]
          %v461 = vld [vmem:[#allocation2 + $0x10] sm:$0xff]
          %v462 = vld [vmem:[#allocation2 + $0x18] sm:$0xff]
          %v463 = vld [vmem:[#allocation2 + $0x20] sm:$0xff]
          %v464 = vld [vmem:[#allocation2 + $0x28] sm:$0xff]
          %v465 = vld [vmem:[#allocation2 + $0x30] sm:$0xff]
          %v466 = vld [vmem:[#allocation2 + $0x38] sm:$0xff]
          %v467 = vperm.slane %v458, 0
          %v468 = vadd.f32 %v459, %v467
          %v469 = vadd.f32 %v460, %v467
          %v470 = vadd.f32 %v461, %v467
          %v471 = vadd.f32 %v462, %v467
          %v472 = vadd.f32 %v463, %v467
          %v473 = vadd.f32 %v464, %v467
          %v474 = vadd.f32 %v465, %v467
          %v475 = vadd.f32 %v466, %v467
          %vm476 = vcmp.ge.f32.partialorder %v468, 0.0
          %vm477 = vcmp.ge.f32.partialorder %v469, 0.0
          %vm478 = vcmp.ge.f32.partialorder %v470, 0.0
          %vm479 = vcmp.ge.f32.partialorder %v471, 0.0
          %vm480 = vcmp.ge.f32.partialorder %v472, 0.0
          %vm481 = vcmp.ge.f32.partialorder %v473, 0.0
          %vm482 = vcmp.ge.f32.partialorder %v474, 0.0
          %vm483 = vcmp.ge.f32.partialorder %v475, 0.0
          %v484 = vmul.f32 %v468, 0.01
          %v485 = vmul.f32 %v469, 0.01
          %v486 = vmul.f32 %v470, 0.01
          %v487 = vmul.f32 %v471, 0.01
          %v488 = vmul.f32 %v472, 0.01
          %v489 = vmul.f32 %v473, 0.01
          %v490 = vmul.f32 %v474, 0.01
          %v491 = vmul.f32 %v475, 0.01
          %v492 = vsel %vm476, %v468, %v484
          %v493 = vsel %vm477, %v469, %v485
          %v494 = vsel %vm478, %v470, %v486
          %v495 = vsel %vm479, %v471, %v487
          %v496 = vsel %vm480, %v472, %v488
          %v497 = vsel %vm481, %v473, %v489
          %v498 = vsel %vm482, %v474, %v490
          %v499 = vsel %vm483, %v475, %v491
          %v500 = vadd.f32 %v492, %v493
          %v501 = vadd.f32 %v500, %v494
          %v502 = vadd.f32 %v501, %v495
          %v503 = vadd.f32 %v502, %v496
          %v504 = vadd.f32 %v503, %v497
          %v505 = vadd.f32 %v504, %v498
          %v506 = vadd.f32 %v505, %v499
          %v507 = vrot.slane %v506, 4
          %v508 = vadd.f32 %v506, %v507
          %v509 = vrot.slane %v508, 2
          %v510 = vadd.f32 %v508, %v509
          %v511 = vrot.slane %v510, 1
          %v512 = vadd.f32 %v510, %v511
          %v513 = vrcp.pop 64.0
          %v514 = vmul.f32 64.0, %v513
          %v515 = vsub.f32 1.0, %v514
          %v516 = vmul.f32 %v513, %v515
          %v517 = vadd.f32 %v513, %v516
          %vm518 = vweird.f32 %v513
          %v519 = vsel %vm518, %v513, %v517
          %v520 = vmul.f32 %v512, %v519
          %v521 = vsub.f32 %v492, %v520
          %v522 = vsub.f32 %v493, %v520
          %v523 = vsub.f32 %v494, %v520
          %v524 = vsub.f32 %v495, %v520
          %v525 = vsub.f32 %v496, %v520
          %v526 = vsub.f32 %v497, %v520
          %v527 = vsub.f32 %v498, %v520
          %v528 = vsub.f32 %v499, %v520
          %v529 = vmul.f32 %v521, %v521
          %v530 = vmul.f32 %v522, %v522
          %v531 = vmul.f32 %v523, %v523
          %v532 = vmul.f32 %v524, %v524
          %v533 = vmul.f32 %v525, %v525
          %v534 = vmul.f32 %v526, %v526
          %v535 = vmul.f32 %v527, %v527
          %v536 = vmul.f32 %v528, %v528
          %v537 = vadd.f32 %v529, %v530
          %v538 = vadd.f32 %v537, %v531
          %v539 = vadd.f32 %v538, %v532
          %v540 = vadd.f32 %v539, %v533
          %v541 = vadd.f32 %v540, %v534
          %v542 = vadd.f32 %v541, %v535
          %v543 = vadd.f32 %v542, %v536
          %v544 = vrot.slane %v543, 4
          %v545 = vadd.f32 %v543, %v544
          %v546 = vrot.slane %v545, 2
          %v547 = vadd.f32 %v545, %v546
          %v548 = vrot.slane %v547, 1
          %v549 = vadd.f32 %v547, %v548
          %v550 = vmul.f32 %v549, %v519
          %v551 = vadd.f32 %v550, 1e-05
          %v552 = vrsqrt.pop %v551
          %v553 = vmul.f32 %v552, %v551
          %v554 = vmul.f32 %v553, %v552
          %v555 = vmul.f32 0.5, %v554
          %v556 = vsub.f32 1.5, %v555
          %v557 = vmul.f32 %v552, %v556
          %vm558 = vweird.f32 %v551
          %vm559 = vweird.f32 %v552
          %vm560 = vmor %vm558, %vm559
          %v561 = vsel %vm560, %v552, %v557
          %v562 = vmul.f32 %v521, %v561
          %v563 = vmul.f32 %v522, %v561
          %v564 = vmul.f32 %v523, %v561
          %v565 = vmul.f32 %v524, %v561
          %v566 = vmul.f32 %v525, %v561
          %v567 = vmul.f32 %v526, %v561
          %v568 = vmul.f32 %v527, %v561
          %v569 = vmul.f32 %v528, %v561
          %v570 = vperm.slane %v458, 1
          %v571 = vmul.f32 %v562, %v570
          %v572 = vmul.f32 %v563, %v570
          %v573 = vmul.f32 %v564, %v570
          %v574 = vmul.f32 %v565, %v570
          %v575 = vmul.f32 %v566, %v570
          %v576 = vmul.f32 %v567, %v570
          %v577 = vmul.f32 %v568, %v570
          %v578 = vmul.f32 %v569, %v570
          %v579 = vperm.slane %v458, 2
          %v580 = vadd.f32 %v571, %v579
          %v581 = vadd.f32 %v572, %v579
          %v582 = vadd.f32 %v573, %v579
          %v583 = vadd.f32 %v574, %v579
          %v584 = vadd.f32 %v575, %v579
          %v585 = vadd.f32 %v576, %v579
          %v586 = vadd.f32 %v577, %v579
          %v587 = vadd.f32 %v578, %v579
          %588 = vst [vmem:[%s351] sm:$0xff] %v580
          %589 = vst [vmem:[%s351 + $0x8] sm:$0xff] %v581
          %590 = vst [vmem:[%s351 + $0x10] sm:$0xff] %v582
          %591 = vst [vmem:[%s351 + $0x18] sm:$0xff] %v583
          %592 = vst [vmem:[%s351 + $0x20] sm:$0xff] %v584
          %593 = vst [vmem:[%s351 + $0x28] sm:$0xff] %v585
          %594 = vst [vmem:[%s351 + $0x30] sm:$0xff] %v586
          %595 = vst [vmem:[%s351 + $0x38] sm:$0xff] %v587
        $region60: #{tpu_custom_call.1} parent=35 // pred_fallthru
          _
        %s596 = sand.u32 %s153, 1
        %s597 = scalar_lea.sflag [#allocation5], %s596
        %s598 = sand.u32 %s153, 1
        %s599 = smul.addr %s598, 64
        %s600 = scalar_lea.vmem [#allocation11], %s599
        // Predicated region
        $region61: #{tpu_custom_call.1} parent=35 // pred_check
          %p601 = pneg %p163
        $region62: #{tpu_custom_call.1} parent=35 // pred_check_branch
          %603 = sbr.rel (%p601) target = $region64
        $region63: #{tpu_custom_call.1} parent=35 // pred_region
          %605 = vsyncadd %s597, 0
          %s606 = smul.addr %s31, 8
          %s607 = scalar_lea.hbm %s4, %s606
          %s608 = sshll.u32 %s600, 4
          %s609 = int_to_ptr.vmem [resolvable:$true] %s608
          %s610 = sshll.u32 %s607, 4
          %s611 = int_to_ptr.hbm [resolvable:$true] %s610
          %616 = dma.vmem_to_hbm [thread:$0]  %s609, 1024, %s611, %s597, 128, 256, 8
        $region64: #{tpu_custom_call.1} parent=35 // pred_fallthru
          _
      $region36: #{tpu_custom_call.1} parent=5 // pred_fallthru
        _
      %p617 = scmp.le.s32.totalorder 2, %s22
      // Predicated region
      $region65: #{tpu_custom_call.1} parent=5 // pred_check
        %p618 = pneg %p617
      $region66: #{tpu_custom_call.1} parent=5 // pred_check_branch
        %620 = sbr.rel (%p618) target = $region68
      $region67: #{tpu_custom_call.1} parent=5 // pred_region
        %s621 = ssub.s32 %s22, 2
        // Predicated region
        $region69: #{tpu_custom_call.1} parent=67 // pred_check
          %p622 = pneg %p169
        $region70: #{tpu_custom_call.1} parent=67 // pred_check_branch
          %624 = sbr.rel (%p622) target = $region72
        $region71: #{tpu_custom_call.1} parent=67 // pred_region
          %s625 = sand.u32 %s154, 1
          %s626 = scalar_lea.sflag [#allocation5], %s625
          %s627 = sand.u32 %s154, 1
          %s628 = smul.addr %s627, 64
          %s629 = scalar_lea.vmem [#allocation11], %s628
          %631 = dma.done %s626, 1024
        $region72: #{tpu_custom_call.1} parent=67 // pred_fallthru
          _
      $region68: #{tpu_custom_call.1} parent=5 // pred_fallthru
        _
    $region6: #{tpu_custom_call.1} parent=1 // loop_footer
      %s26 = sadd.s32 1, %s22
    $region7: #{tpu_custom_call.1} parent=1 // loop_footer_branch
      %21 = sbr.rel target = $region3
    $region8: #{tpu_custom_call.1} parent=1 // loop_exit
      _
    %632 = vsyncpa [#allocation4], 1
    %s633 = scalar_lea.sflag [#allocation4], 1
    %634 = vsyncpa %s633, 1
    %635 = vsyncpa [#allocation7], 1
    %s636 = scalar_lea.sflag [#allocation7], 1
    %637 = vsyncpa %s636, 1
    %638 = vsyncpa [#allocation10], 1
    %s639 = scalar_lea.sflag [#allocation10], 1
    %640 = vsyncpa %s639, 1
    %641 = vsyncpa [#allocation5], 1
    %s642 = scalar_lea.sflag [#allocation5], 1
    %643 = vsyncpa %s642, 1

</llo_original>
